<compile_context>
chip_gen: v6e
topology: v6e:2x2x1
jax: 0.10.0
libtpu: 0.0.40
codegen_flags: <defaults>
</compile_context>

<pallas_src>
import functools

import jax
import jax.numpy as jnp
from jax import lax
from jax.experimental import pallas as pl
from jax.experimental.pallas import tpu as pltpu


def _round_up(n, m):
    return ((n + m - 1) // m) * m


def _vq_kernel(x_ref, w_ref, w2h_ref, q_ref, sse_ref, cnt_ref, *, mm_dtype):
    # x_ref:   (tm, D)    tile of flattened inputs (native dtype)
    # w_ref:   (Kp, D)    codebook, K padded to Kp (multiple of 128) with zero rows
    # w2h_ref: (1, Kp)    0.5 * ||w_k||^2 (f32), +inf on pad columns
    # q_ref:   (tm, D)    quantized output tile
    # sse_ref: (1, 1, 1)  per-tile partial sum of squared error
    # cnt_ref: (1, 1, Kp) per-tile partial codeword counts (lane-dense)
    x = x_ref[...]                                   # (tm, D)
    w = w_ref[...]                                   # (Kp, D)
    w2h = w2h_ref[...]                               # (1, Kp) f32
    tm = x.shape[0]
    kp = w.shape[0]

    # argmin_k ||x - w_k||^2 == argmin_k (0.5*||w_k||^2 - x.w_k)
    xd = x if x.dtype == mm_dtype else x.astype(mm_dtype)
    wd = w if w.dtype == mm_dtype else w.astype(mm_dtype)
    xw = lax.dot_general(xd, wd, (((1,), (1,)), ((), ())),
                         preferred_element_type=jnp.float32)        # (tm, Kp) on MXU
    dist = w2h - xw                                                  # (tm, Kp), +inf on pads

    # first-occurrence argmin (matches torch.argmin) + one-hot without recompute
    min_d = jnp.min(dist, axis=1, keepdims=True)                     # (tm, 1)
    col = lax.broadcasted_iota(jnp.int32, dist.shape, 1)             # (tm, Kp)
    masked_col = jnp.where(dist <= min_d, col, kp)                   # (tm, Kp)
    idx = jnp.min(masked_col, axis=1, keepdims=True)                 # (tm, 1)
    onehot = (masked_col == idx).astype(jnp.float32)                 # (tm, Kp), one 1 per row

    # quantized = encodings @ W (same as torch scatter + matmul), f32 accumulation
    q = lax.dot_general(onehot.astype(w.dtype), w, (((1,), (0,)), ((), ())),
                        preferred_element_type=jnp.float32)          # (tm, D) on MXU
    q_ref[...] = q.astype(q_ref.dtype)

    diff = q - x.astype(jnp.float32)
    sse_ref[...] = jnp.sum(diff * diff, keepdims=True)[None]         # (1, 1, 1)

    # codeword counts on the MXU (it has slack when D << 128): ones @ onehot
    ones = jnp.ones((8, tm), dtype=jnp.float32)
    csum = lax.dot_general(ones, onehot, (((1,), (0,)), ((), ())),
                           preferred_element_type=jnp.float32)       # (8, Kp)
    cnt_ref[...] = csum[0:1, :][None]                                # (1, 1, Kp)


def vector_quantizer_forward(x, embedding_weight, commitment_cost=0.25, tm=512,
                             distance_matmul_dtype=None):
    """Forward pass of VectorQuantizer. Returns (quantized, loss, perplexity)."""
    K, D = embedding_weight.shape
    x_shape = x.shape
    flat_x = x.reshape(-1, D)
    N = flat_x.shape[0]

    # --- codebook prep: pad K to a lane-dense multiple of 128 -----------------
    Kp = _round_up(K, 128)
    w_sq_half = 0.5 * jnp.sum(embedding_weight.astype(jnp.float32) ** 2, axis=1)   # (K,)
    w2h_padded = jnp.full((Kp,), jnp.inf, jnp.float32).at[:K].set(w_sq_half)[None, :]
    w_padded = (embedding_weight if Kp == K
                else jnp.pad(embedding_weight, ((0, Kp - K), (0, 0))))

    # --- row tiling: big tile, capped so (tm, Kp) intermediates fit VMEM ------
    # ~6 live f32 (tm, Kp) arrays + a few (tm, D) f32 temps per grid step.
    lane = lambda n: _round_up(n, 128)
    inter_budget = 16 * 1024 * 1024                       # headroom for v7x's 64 MiB VMEM
    per_row_bytes = 6 * lane(Kp) * 4 + 8 * lane(D) * 4
    tm_cap = max(8, (inter_budget // per_row_bytes) // 8 * 8)
    tm = max(8, min(tm, tm_cap, _round_up(N, 8)))
    num_tiles = pl.cdiv(N, tm)
    n_pad = num_tiles * tm
    if n_pad != N:
        flat_x = jnp.pad(flat_x, ((0, n_pad - N), (0, 0)))  # pad rows are exact zeros
    # TODO(synk): for huge codebooks (tm*Kp or Kp*D beyond the VMEM budget) add a
    # K grid axis / in-kernel K chunking with a running (min, argmin) instead of
    # one resident padded codebook.

    mm_dtype = (jnp.dtype(distance_matmul_dtype) if distance_matmul_dtype is not None
                else jnp.result_type(x.dtype, embedding_weight.dtype))

    # --- VMEM budget for the compiler (default scoped limit is 16/32 MiB) -----
    x_b = jnp.dtype(x.dtype).itemsize
    w_b = jnp.dtype(embedding_weight.dtype).itemsize
    est = (2 * tm * lane(D) * x_b          # x tile (double buffered)
           + 2 * tm * lane(D) * x_b        # quantized tile
           + 2 * Kp * lane(D) * w_b        # codebook (grid-invariant, still 2-buffered)
           + 4 * 8 * lane(Kp) * 4          # 0.5*||w||^2 + count partials
           + 2 * 8 * 128 * 4               # sse partials
           + 6 * tm * lane(Kp) * 4         # (tm, Kp) live f32 intermediates
           + 4 * tm * lane(D) * 4)         # f32 q / diff temps
    vmem_limit = int(min(64 << 20, max(32 << 20, 2 * est)))
    # NOTE: for very large K*D the grid-invariant codebook/norm inputs could be
    # single-buffered (pipeline_mode=pl.Buffered(1)) to halve their footprint.
    # TODO(synk): lane-dense repack of the (tm, D) quantized store (D<128) was
    # deferred: it needs an in-kernel minor-dim reshape (Mosaic relayout risk).

    kernel = functools.partial(_vq_kernel, mm_dtype=mm_dtype)

    quantized_flat, sse_partials, cnt_partials = pl.pallas_call(
        kernel,
        out_shape=(
            jax.ShapeDtypeStruct((n_pad, D), x.dtype),
            jax.ShapeDtypeStruct((num_tiles, 1, 1), jnp.float32),
            jax.ShapeDtypeStruct((num_tiles, 1, Kp), jnp.float32),
        ),
        grid_spec=pltpu.PrefetchScalarGridSpec(
            num_scalar_prefetch=0,
            grid=(num_tiles,),
            in_specs=[
                pl.BlockSpec((tm, D), lambda i: (i, 0)),    # x tile
                pl.BlockSpec((Kp, D), lambda i: (0, 0)),    # padded codebook (resident)
                pl.BlockSpec((1, Kp), lambda i: (0, 0)),    # 0.5*||w||^2 (resident)
            ],
            out_specs=[
                pl.BlockSpec((tm, D), lambda i: (i, 0)),        # quantized tile
                pl.BlockSpec((1, 1, 1), lambda i: (i, 0, 0)),   # per-tile sse partial
                pl.BlockSpec((1, 1, Kp), lambda i: (i, 0, 0)),  # per-tile counts (lane dense)
            ],
        ),
        compiler_params=pltpu.CompilerParams(
            dimension_semantics=("parallel",),    # independent tiles -> both TCs on v7x
            vmem_limit_bytes=vmem_limit),
    )(flat_x, w_padded, w2h_padded)

    sse = jnp.sum(sse_partials)
    counts = jnp.sum(cnt_partials, axis=(0, 1))[:K]                  # (K,)

    # Remove the contribution of the zero pad rows: each one quantizes to the
    # codeword with the smallest norm (exactly what the kernel computed, since
    # dist for a zero row is just 0.5*||w||^2).
    if n_pad != N:
        n_extra = n_pad - N
        k0 = jnp.argmin(w_sq_half)                # first occurrence, like the kernel
        counts = counts - n_extra * jax.nn.one_hot(k0, K, dtype=counts.dtype)
        sse = sse - jnp.float32(2 * n_extra) * w_sq_half[k0]

    # F.mse_loss(q, x): e_latent_loss and q_latent_loss share the same forward value.
    mse = sse / jnp.float32(N * D)
    loss = (1.0 + commitment_cost) * mse

    # Straight-through estimator: forward value of x + (q - x).detach() is just q.
    # TODO(synk): forward-only; a custom_vjp is needed to reproduce the STE /
    # separate detach-based loss gradients for training.
    quantized = quantized_flat[:N].reshape(x_shape)

    avg_probs = counts / jnp.float32(N)
    perplexity = jnp.exp(-jnp.sum(avg_probs * jnp.log(avg_probs + 1e-10)))
    return quantized, loss, perplexity


def _reference_forward(x, w, commitment_cost=0.25):
    """Pure-JAX reference mirroring the PyTorch forward, for a correctness check."""
    D = w.shape[1]
    x_shape = x.shape
    flat_x = x.reshape(-1, D)
    dist = (jnp.sum(flat_x**2, axis=1, keepdims=True)
            + jnp.sum(w**2, axis=1)
            - 2.0 * flat_x @ w.T)
    idx = jnp.argmin(dist, axis=1)
    enc = jax.nn.one_hot(idx, w.shape[0], dtype=jnp.float32)
    q = (enc @ w).reshape(x_shape)
    mse = jnp.mean((q - x) ** 2)
    loss = (1.0 + commitment_cost) * mse
    avg_probs = jnp.mean(enc, axis=0)
    perplexity = jnp.exp(-jnp.sum(avg_probs * jnp.log(avg_probs + 1e-10)))
    return q, loss, perplexity


if __name__ == "__main__":
    num_embeddings = 64     # K
    embedding_dim = 32      # D
    commitment_cost = 0.25
    B, H, W = 2, 8, 8       # N = B*H*W = 128

    key = jax.random.PRNGKey(0)
    kx, kw = jax.random.split(key)

    # layout: (B, H, W, D) channels-last input, last dim == embedding_dim
    x = jax.random.normal(kx, (B, H, W, embedding_dim), dtype=jnp.float32)
    # nn.Embedding weight init: uniform(-1/K, 1/K)
    emb_w = jax.random.uniform(
        kw, (num_embeddings, embedding_dim), dtype=jnp.float32,
        minval=-1.0 / num_embeddings, maxval=1.0 / num_embeddings)

    quantized, loss, perplexity = vector_quantizer_forward(
        x, emb_w, commitment_cost=commitment_cost)
    jax.block_until_ready((quantized, loss, perplexity))

    # sanity-check against a pure-JAX reference
    q_ref, loss_ref, ppl_ref = _reference_forward(x, emb_w, commitment_cost)
    assert quantized.shape == x.shape
    assert jnp.allclose(quantized, q_ref, atol=1e-4, rtol=1e-4)
    assert jnp.allclose(loss, loss_ref, atol=1e-5, rtol=1e-5)
    assert jnp.allclose(perplexity, ppl_ref, atol=1e-4, rtol=1e-4)

    # ragged / padded case (N = 2*7*9 = 126, not divisible by 8 or tm) exercises
    # the zero-pad-row correction path.
    x2 = jax.random.normal(jax.random.PRNGKey(1), (2, 7, 9, embedding_dim),
                           dtype=jnp.float32)
    q2, l2, p2 = vector_quantizer_forward(x2, emb_w, commitment_cost)
    jax.block_until_ready((q2, l2, p2))
    q2r, l2r, p2r = _reference_forward(x2, emb_w, commitment_cost)
    assert jnp.allclose(q2, q2r, atol=1e-4, rtol=1e-4)
    assert jnp.allclose(l2, l2r, atol=1e-5, rtol=1e-5)
    assert jnp.allclose(p2, p2r, atol=1e-4, rtol=1e-4)

    # low-precision distance matmul path (preferred on v6e/v7x MXU); argmin may
    # flip on near-ties, so only loss is checked loosely.
    q3, l3, p3 = vector_quantizer_forward(
        x, emb_w, commitment_cost, distance_matmul_dtype=jnp.bfloat16)
    jax.block_until_ready((q3, l3, p3))
    assert q3.shape == x.shape
    assert jnp.allclose(l3, loss_ref, atol=1e-2, rtol=1e-2)

    print("KERNEL_OK")
</pallas_src>

<mosaic_0001>
module attributes {stable_mosaic.version = 11 : i64} {
  func.func @_vq_kernel(%arg0: i32, %arg1: memref<128x32xf32, #tpu.memory_space<vmem>>, %arg2: memref<128x32xf32, #tpu.memory_space<vmem>>, %arg3: memref<1x128xf32, #tpu.memory_space<vmem>>, %arg4: memref<128x32xf32, #tpu.memory_space<vmem>>, %arg5: memref<1x1x1xf32, #tpu.memory_space<vmem>>, %arg6: memref<1x1x128xf32, #tpu.memory_space<vmem>>) attributes {dimension_semantics = [#tpu.dimension_semantics<parallel>], iteration_bounds = array<i64: 1>, scalar_prefetch = 0 : i64, scratch_operands = 0 : i64, tpu.core_type = #tpu.core_type<tc>, window_params = [{transform_indices = @transform_0, window_bounds = array<i64: 128, 32>}, {pipeline_mode = #tpu.pipeline_mode<synchronous>, transform_indices = @transform_1, window_bounds = array<i64: 128, 32>}, {pipeline_mode = #tpu.pipeline_mode<synchronous>, transform_indices = @transform_2, window_bounds = array<i64: 1, 128>}, {transform_indices = @transform_3, window_bounds = array<i64: 128, 32>}, {transform_indices = @transform_4, window_bounds = array<i64: 1, 1, 1>}, {transform_indices = @transform_5, window_bounds = array<i64: 1, 1, 128>}]} {
    %c0 = arith.constant 0 : index
    %c0_0 = arith.constant 0 : index
    %0 = vector.load %arg1[%c0, %c0_0] : memref<128x32xf32, #tpu.memory_space<vmem>>, vector<128x32xf32>
    %c0_1 = arith.constant 0 : index
    %c0_2 = arith.constant 0 : index
    %1 = vector.load %arg2[%c0_1, %c0_2] : memref<128x32xf32, #tpu.memory_space<vmem>>, vector<128x32xf32>
    %c0_3 = arith.constant 0 : index
    %c0_4 = arith.constant 0 : index
    %2 = vector.load %arg3[%c0_3, %c0_4] : memref<1x128xf32, #tpu.memory_space<vmem>>, vector<1x128xf32>
    %cst = arith.constant dense<0.000000e+00> : vector<128x128xf32>
    %3 = tpu.matmul %0, %1, %cst {dimension_numbers = #tpu.dot_dimension_numbers<[1], [1], [0], [0], [0, 0, 1, 0], [], []>} : vector<128x32xf32>, vector<128x32xf32>, vector<128x128xf32> -> vector<128x128xf32>
    %4 = vector.broadcast %2 : vector<1x128xf32> to vector<128x128xf32>
    %5 = arith.subf %4, %3 : vector<128x128xf32>
    %cst_5 = arith.constant dense<0x7F800000> : vector<128xf32>
    %6 = vector.multi_reduction <minimumf>, %5, %cst_5 [1] : vector<128x128xf32> to vector<128xf32>
    %7 = vector.shape_cast %6 : vector<128xf32> to vector<128x1xf32>
    %8 = tpu.iota {dimensions = array<i32: 1>} : vector<128x128xi32>
    %9 = vector.broadcast %7 : vector<128x1xf32> to vector<128x128xf32>
    %10 = arith.cmpf ole, %5, %9 : vector<128x128xf32>
    %c128_i32 = arith.constant 128 : i32
    %11 = vector.broadcast %c128_i32 : i32 to vector<128x128xi32>
    %12 = arith.select %10, %8, %11 : vector<128x128xi1>, vector<128x128xi32>
    %cst_6 = arith.constant dense<2147483647> : vector<128xi32>
    %13 = vector.multi_reduction <minsi>, %12, %cst_6 [1] : vector<128x128xi32> to vector<128xi32>
    %14 = vector.shape_cast %13 : vector<128xi32> to vector<128x1xi32>
    %15 = vector.broadcast %14 : vector<128x1xi32> to vector<128x128xi32>
    %16 = arith.cmpi eq, %12, %15 : vector<128x128xi32>
    %17 = arith.extui %16 : vector<128x128xi1> to vector<128x128xi32>
    %18 = arith.sitofp %17 : vector<128x128xi32> to vector<128x128xf32>
    %cst_7 = arith.constant dense<0.000000e+00> : vector<128x32xf32>
    %19 = tpu.matmul %18, %1, %cst_7 {dimension_numbers = #tpu.dot_dimension_numbers<[1], [0], [0], [1], [0, 0, 1, 1], [], []>} : vector<128x128xf32>, vector<128x32xf32>, vector<128x32xf32> -> vector<128x32xf32>
    %c0_8 = arith.constant 0 : index
    %c0_9 = arith.constant 0 : index
    %20 = vector.load %arg4[%c0_8, %c0_9] : memref<128x32xf32, #tpu.memory_space<vmem>>, vector<128x32xf32>
    tpu.vector_store %arg4[%c0_8, %c0_9], %19 {strides = array<i32>} : memref<128x32xf32, #tpu.memory_space<vmem>>, vector<128x32xf32>,
    %21 = arith.subf %19, %0 : vector<128x32xf32>
    %22 = arith.mulf %21, %21 : vector<128x32xf32>
    %23 = vector.shape_cast %22 : vector<128x32xf32> to vector<1x128x32xf32>
    %cst_10 = arith.constant dense<0.000000e+00> : vector<1xf32>
    %24 = vector.multi_reduction <add>, %23, %cst_10 [1, 2] : vector<1x128x32xf32> to vector<1xf32>
    %25 = vector.shape_cast %24 : vector<1xf32> to vector<1x1x1xf32>
    %26 = vector.extract %25[0, 0, 0] : f32 from vector<1x1x1xf32>
    %27 = vector.broadcast %26 : f32 to vector<1x1xf32>
    %28 = vector.shape_cast %27 : vector<1x1xf32> to vector<1x1x1xf32>
    %c0_11 = arith.constant 0 : index
    %c0_12 = arith.constant 0 : index
    %c0_13 = arith.constant 0 : index
    %29 = vector.load %arg5[%c0_11, %c0_12, %c0_13] : memref<1x1x1xf32, #tpu.memory_space<vmem>>, vector<1x1x1xf32>
    tpu.vector_store %arg5[%c0_11, %c0_12, %c0_13], %28 {strides = array<i32>} : memref<1x1x1xf32, #tpu.memory_space<vmem>>, vector<1x1x1xf32>,
    %cst_14 = arith.constant 1.000000e+00 : f32
    %30 = vector.broadcast %cst_14 : f32 to vector<8x128xf32>
    %cst_15 = arith.constant dense<0.000000e+00> : vector<8x128xf32>
    %31 = tpu.matmul %30, %18, %cst_15 {dimension_numbers = #tpu.dot_dimension_numbers<[1], [0], [0], [1], [0, 0, 1, 1], [], []>} : vector<8x128xf32>, vector<128x128xf32>, vector<8x128xf32> -> vector<8x128xf32>
    %32 = vector.extract_strided_slice %31 {offsets = [0, 0], sizes = [1, 128], strides = [1, 1]} : vector<8x128xf32> to vector<1x128xf32>
    %33 = vector.shape_cast %32 : vector<1x128xf32> to vector<1x1x128xf32>
    %c0_16 = arith.constant 0 : index
    %c0_17 = arith.constant 0 : index
    %c0_18 = arith.constant 0 : index
    %34 = vector.load %arg6[%c0_16, %c0_17, %c0_18] : memref<1x1x128xf32, #tpu.memory_space<vmem>>, vector<1x1x128xf32>
    tpu.vector_store %arg6[%c0_16, %c0_17, %c0_18], %33 {strides = array<i32>} : memref<1x1x128xf32, #tpu.memory_space<vmem>>, vector<1x1x128xf32>,
    return
  }
  func.func @transform_0(%arg0: i32) -> (i32, i32) {
    %c0_i32 = arith.constant 0 : i32
    %c0_i32_0 = arith.constant 0 : i32
    return %arg0, %c0_i32 : i32, i32
  }
  func.func @transform_1(%arg0: i32) -> (i32, i32) {
    %c0_i32 = arith.constant 0 : i32
    %c0_i32_0 = arith.constant 0 : i32
    %c0_i32_1 = arith.constant 0 : i32
    return %c0_i32, %c0_i32_0 : i32, i32
  }
  func.func @transform_2(%arg0: i32) -> (i32, i32) {
    %c0_i32 = arith.constant 0 : i32
    %c0_i32_0 = arith.constant 0 : i32
    %c0_i32_1 = arith.constant 0 : i32
    return %c0_i32, %c0_i32_0 : i32, i32
  }
  func.func @transform_3(%arg0: i32) -> (i32, i32) {
    %c0_i32 = arith.constant 0 : i32
    %c0_i32_0 = arith.constant 0 : i32
    return %arg0, %c0_i32 : i32, i32
  }
  func.func @transform_4(%arg0: i32) -> (i32, i32, i32) {
    %c0_i32 = arith.constant 0 : i32
    %c0_i32_0 = arith.constant 0 : i32
    %c0_i32_1 = arith.constant 0 : i32
    return %arg0, %c0_i32, %c0_i32_0 : i32, i32, i32
  }
  func.func @transform_5(%arg0: i32) -> (i32, i32, i32) {
    %c0_i32 = arith.constant 0 : i32
    %c0_i32_0 = arith.constant 0 : i32
    %c0_i32_1 = arith.constant 0 : i32
    return %arg0, %c0_i32, %c0_i32_0 : i32, i32, i32
  }
}

</mosaic_0001>

<llo_original>
// kernel: tpu_custom_call.1
$region0: #{tpu_custom_call.1}
  #allocation0 [shape = 'u32[]', space=smem, size = 0x4, offset = 0x4, fixed_abs, tag = 'smem constant byte address 0x4 - core index']
  #allocation1 [shape = 'u32[144,128]{1,0:T(1,128)}', space=vmem, size = 0x12000, scoped, tag = 'internal scratch']
  %s0 = inlined_call_operand.vmem [shape: f32[128,32], index: 0, kind: input, shape index: {}]
  %s1 = inlined_call_operand.vmem [shape: f32[128,32], index: 1, kind: input, shape index: {}]
  %s2 = inlined_call_operand.vmem [shape: f32[1,128], index: 2, kind: input, shape index: {}]
  %s3 = inlined_call_operand.vmem [shape: f32[128,32], index: 3, kind: output, shape index: {0}]
  %s4 = inlined_call_operand.hbm [shape: f32[1,1,1], index: 4, kind: output, shape index: {1}]
  %s5 = inlined_call_operand.hbm [shape: f32[1,1,128], index: 5, kind: output, shape index: {2}]
  %6 = xla_tuple %s3, %s4, %s5
  %s7 = sld [smem:[#allocation0]]
  $region38: #{tpu_custom_call.1} parent=0
    _
  %s9 = ssub.s32 1, %s7
  %s10 = scalar_select 0, %s9, %s7
  $region1: #{tpu_custom_call.1} parent=0
    #allocation2 [shape = 'u8[512]{0}', space=vmem, size = 0x400, scoped, tag = 'output window, operand 1, single buffered']
    #allocation3 [shape = 's32[1]{0}', space=sflag, size = 0x4, scoped, tag = 'scoped memory for tpu_custom_call.1']
    #allocation4 [shape = 'u8[512]{0}', space=vmem, size = 0x400, scoped, tag = 'output window, operand 2, single buffered']
    #allocation5 [shape = 's32[1]{0}', space=sflag, size = 0x4, scoped, tag = 'scoped memory for tpu_custom_call.1']
    %11 = vsyncpa [#allocation3], 0
    %12 = vsyncpa [#allocation5], 0
    // Predicated region
    $region2: #{tpu_custom_call.1} parent=1 // pred_check
      _
    $region3: #{tpu_custom_call.1} parent=1 // pred_check_branch
      %14 = sbr.rel (0) target = $region5
    $region4: #{tpu_custom_call.1} parent=1 // pred_region
      _
    $region5: #{tpu_custom_call.1} parent=1 // pred_fallthru
      _
    // Predicated region
    $region6: #{tpu_custom_call.1} parent=1 // pred_check
      _
    $region7: #{tpu_custom_call.1} parent=1 // pred_check_branch
      %16 = sbr.rel (0) target = $region9
    $region8: #{tpu_custom_call.1} parent=1 // pred_region
      _
    $region9: #{tpu_custom_call.1} parent=1 // pred_fallthru
      _
    // Predicated region
    $region10: #{tpu_custom_call.1} parent=1 // pred_check
      _
    $region11: #{tpu_custom_call.1} parent=1 // pred_check_branch
      %18 = sbr.rel (0) target = $region13
    $region12: #{tpu_custom_call.1} parent=1 // pred_region
      _
    $region13: #{tpu_custom_call.1} parent=1 // pred_fallthru
      _
    %v19 = vld [vmem:[%s0] sm:$0xff]
    %v20 = vld [vmem:[%s0 + $0x8] sm:$0xff]
    %v21 = vld [vmem:[%s0 + $0x10] sm:$0xff]
    %v22 = vld [vmem:[%s0 + $0x18] sm:$0xff]
    %v23 = vld [vmem:[%s0 + $0x20] sm:$0xff]
    %v24 = vld [vmem:[%s0 + $0x28] sm:$0xff]
    %v25 = vld [vmem:[%s0 + $0x30] sm:$0xff]
    %v26 = vld [vmem:[%s0 + $0x38] sm:$0xff]
    %v27 = vld [vmem:[%s0 + $0x40] sm:$0xff]
    %v28 = vld [vmem:[%s0 + $0x48] sm:$0xff]
    %v29 = vld [vmem:[%s0 + $0x50] sm:$0xff]
    %v30 = vld [vmem:[%s0 + $0x58] sm:$0xff]
    %v31 = vld [vmem:[%s0 + $0x60] sm:$0xff]
    %v32 = vld [vmem:[%s0 + $0x68] sm:$0xff]
    %v33 = vld [vmem:[%s0 + $0x70] sm:$0xff]
    %v34 = vld [vmem:[%s0 + $0x78] sm:$0xff]
    %v35 = vld [vmem:[%s1] sm:$0xff]
    %v36 = vld [vmem:[%s1 + $0x8] sm:$0xff]
    %v37 = vld [vmem:[%s1 + $0x10] sm:$0xff]
    %v38 = vld [vmem:[%s1 + $0x18] sm:$0xff]
    %v39 = vld [vmem:[%s1 + $0x20] sm:$0xff]
    %v40 = vld [vmem:[%s1 + $0x28] sm:$0xff]
    %v41 = vld [vmem:[%s1 + $0x30] sm:$0xff]
    %v42 = vld [vmem:[%s1 + $0x38] sm:$0xff]
    %v43 = vld [vmem:[%s1 + $0x40] sm:$0xff]
    %v44 = vld [vmem:[%s1 + $0x48] sm:$0xff]
    %v45 = vld [vmem:[%s1 + $0x50] sm:$0xff]
    %v46 = vld [vmem:[%s1 + $0x58] sm:$0xff]
    %v47 = vld [vmem:[%s1 + $0x60] sm:$0xff]
    %v48 = vld [vmem:[%s1 + $0x68] sm:$0xff]
    %v49 = vld [vmem:[%s1 + $0x70] sm:$0xff]
    %v50 = vld [vmem:[%s1 + $0x78] sm:$0xff]
    %v51 = vld [vmem:[%s2] sm:$0x1]
    %vm52 = vcmask 261120
    %v54 = vsel %vm52, %v19, 0
    %v57 = vsel %vm52, %v20, 0
    %v60 = vsel %vm52, %v21, 0
    %v63 = vsel %vm52, %v22, 0
    %v66 = vsel %vm52, %v23, 0
    %v69 = vsel %vm52, %v24, 0
    %v72 = vsel %vm52, %v25, 0
    %v75 = vsel %vm52, %v26, 0
    %v78 = vsel %vm52, %v27, 0
    %v81 = vsel %vm52, %v28, 0
    %v84 = vsel %vm52, %v29, 0
    %v87 = vsel %vm52, %v30, 0
    %v90 = vsel %vm52, %v31, 0
    %v93 = vsel %vm52, %v32, 0
    %v96 = vsel %vm52, %v33, 0
    %v99 = vsel %vm52, %v34, 0
    %v102 = vsel %vm52, %v35, 0
    %v105 = vsel %vm52, %v36, 0
    %v108 = vsel %vm52, %v37, 0
    %v111 = vsel %vm52, %v38, 0
    %v114 = vsel %vm52, %v39, 0
    %v117 = vsel %vm52, %v40, 0
    %v120 = vsel %vm52, %v41, 0
    %v123 = vsel %vm52, %v42, 0
    %v126 = vsel %vm52, %v43, 0
    %v129 = vsel %vm52, %v44, 0
    %v132 = vsel %vm52, %v45, 0
    %v135 = vsel %vm52, %v46, 0
    %v138 = vsel %vm52, %v47, 0
    %v141 = vsel %vm52, %v48, 0
    %v144 = vsel %vm52, %v49, 0
    %v147 = vsel %vm52, %v50, 0
    %149 = vmatprep.subr.mxu0 0.0
    %150 = vmatpush1.xpose.msra.mxu0 %v147
    %151 = vmatprep.subr.mxu0 0.0
    %152 = vmatpush1.xpose.msra.mxu0 %v144
    %153 = vmatprep.subr.mxu0 0.0
    %154 = vmatpush1.xpose.msra.mxu0 %v141
    %155 = vmatprep.subr.mxu0 0.0
    %156 = vmatpush1.xpose.msra.mxu0 %v138
    %157 = vmatprep.subr.mxu0 0.0
    %158 = vmatpush1.xpose.msra.mxu0 %v135
    %159 = vmatprep.subr.mxu0 0.0
    %160 = vmatpush1.xpose.msra.mxu0 %v132
    %161 = vmatprep.subr.mxu0 0.0
    %162 = vmatpush1.xpose.msra.mxu0 %v129
    %163 = vmatprep.subr.mxu0 0.0
    %164 = vmatpush1.xpose.msra.mxu0 %v126
    %165 = vmatprep.subr.mxu0 0.0
    %166 = vmatpush1.xpose.msra.mxu0 %v123
    %167 = vmatprep.subr.mxu0 0.0
    %168 = vmatpush1.xpose.msra.mxu0 %v120
    %169 = vmatprep.subr.mxu0 0.0
    %170 = vmatpush1.xpose.msra.mxu0 %v117
    %171 = vmatprep.subr.mxu0 0.0
    %172 = vmatpush1.xpose.msra.mxu0 %v114
    %173 = vmatprep.subr.mxu0 0.0
    %174 = vmatpush1.xpose.msra.mxu0 %v111
    %175 = vmatprep.subr.mxu0 0.0
    %176 = vmatpush1.xpose.msra.mxu0 %v108
    %177 = vmatprep.subr.mxu0 0.0
    %178 = vmatpush1.xpose.msra.mxu0 %v105
    %179 = vmatprep.subr.mxu0 0.0
    %180 = vmatpush1.xpose.msra.mxu0 %v102
    %181 = vmatprep.subr.mxu0 0.0
    %182 = vmatpush2.xpose.msra.mxu0 0.0
    %183 = vmatprep.subr.mxu0 0.0
    %184 = vmatpush2.xpose.msra.mxu0 0.0
    %185 = vmatprep.subr.mxu0 0.0
    %186 = vmatpush2.xpose.msra.mxu0 0.0
    %187 = vmatprep.subr.mxu0 0.0
    %188 = vmatpush2.xpose.msra.mxu0 0.0
    %189 = vmatprep.subr.mxu0 0.0
    %190 = vmatpush2.xpose.msra.mxu0 0.0
    %191 = vmatprep.subr.mxu0 0.0
    %192 = vmatpush2.xpose.msra.mxu0 0.0
    %193 = vmatprep.subr.mxu0 0.0
    %194 = vmatpush2.xpose.msra.mxu0 0.0
    %195 = vmatprep.subr.mxu0 0.0
    %196 = vmatpush2.xpose.msra.mxu0 0.0
    %197 = vmatprep.subr.mxu0 0.0
    %198 = vmatpush2.xpose.msra.mxu0 0.0
    %199 = vmatprep.subr.mxu0 0.0
    %200 = vmatpush2.xpose.msra.mxu0 0.0
    %201 = vmatprep.subr.mxu0 0.0
    %202 = vmatpush2.xpose.msra.mxu0 0.0
    %203 = vmatprep.subr.mxu0 0.0
    %204 = vmatpush2.xpose.msra.mxu0 0.0
    %205 = vmatprep.subr.mxu0 0.0
    %206 = vmatpush2.xpose.msra.mxu0 0.0
    %207 = vmatprep.subr.mxu0 0.0
    %208 = vmatpush2.xpose.msra.mxu0 0.0
    %209 = vmatprep.subr.mxu0 0.0
    %210 = vmatpush2.xpose.msra.mxu0 0.0
    %211 = vmatprep.subr.mxu0 0.0
    %212 = vmatpush2.xpose.msra.mxu0 0.0
    %213 = vmatprep.mubr.f32.mxu0 0.0
    %214 = vmatmul.mubr.f32.gmra.mxu0 %v54
    %v215 = vpop.f32.mrf.mxu0
    %v216 = vadd.f32 0.0, %v215
    %v217 = vpop.f32.mrf.mxu0
    %218 = vmatprep.mubr.f32.mxu0 0.0
    %219 = vmatmul.mubr.f32.gmra.mxu0 %v57
    %v220 = vpop.f32.mrf.mxu0
    %v221 = vadd.f32 0.0, %v220
    %v222 = vpop.f32.mrf.mxu0
    %223 = vmatprep.mubr.f32.mxu0 0.0
    %224 = vmatmul.mubr.f32.gmra.mxu0 %v60
    %v225 = vpop.f32.mrf.mxu0
    %v226 = vadd.f32 0.0, %v225
    %v227 = vpop.f32.mrf.mxu0
    %228 = vmatprep.mubr.f32.mxu0 0.0
    %229 = vmatmul.mubr.f32.gmra.mxu0 %v63
    %v230 = vpop.f32.mrf.mxu0
    %v231 = vadd.f32 0.0, %v230
    %v232 = vpop.f32.mrf.mxu0
    %233 = vmatprep.mubr.f32.mxu0 0.0
    %234 = vmatmul.mubr.f32.gmra.mxu0 %v66
    %v235 = vpop.f32.mrf.mxu0
    %v236 = vadd.f32 0.0, %v235
    %v237 = vpop.f32.mrf.mxu0
    %238 = vmatprep.mubr.f32.mxu0 0.0
    %239 = vmatmul.mubr.f32.gmra.mxu0 %v69
    %v240 = vpop.f32.mrf.mxu0
    %v241 = vadd.f32 0.0, %v240
    %v242 = vpop.f32.mrf.mxu0
    %243 = vmatprep.mubr.f32.mxu0 0.0
    %244 = vmatmul.mubr.f32.gmra.mxu0 %v72
    %v245 = vpop.f32.mrf.mxu0
    %v246 = vadd.f32 0.0, %v245
    %v247 = vpop.f32.mrf.mxu0
    %248 = vmatprep.mubr.f32.mxu0 0.0
    %249 = vmatmul.mubr.f32.gmra.mxu0 %v75
    %v250 = vpop.f32.mrf.mxu0
    %v251 = vadd.f32 0.0, %v250
    %v252 = vpop.f32.mrf.mxu0
    %253 = vmatprep.mubr.f32.mxu0 0.0
    %254 = vmatmul.mubr.f32.gmra.mxu0 %v78
    %v255 = vpop.f32.mrf.mxu0
    %v256 = vadd.f32 0.0, %v255
    %v257 = vpop.f32.mrf.mxu0
    %258 = vmatprep.mubr.f32.mxu0 0.0
    %259 = vmatmul.mubr.f32.gmra.mxu0 %v81
    %v260 = vpop.f32.mrf.mxu0
    %v261 = vadd.f32 0.0, %v260
    %v262 = vpop.f32.mrf.mxu0
    %263 = vmatprep.mubr.f32.mxu0 0.0
    %264 = vmatmul.mubr.f32.gmra.mxu0 %v84
    %v265 = vpop.f32.mrf.mxu0
    %v266 = vadd.f32 0.0, %v265
    %v267 = vpop.f32.mrf.mxu0
    %268 = vmatprep.mubr.f32.mxu0 0.0
    %269 = vmatmul.mubr.f32.gmra.mxu0 %v87
    %v270 = vpop.f32.mrf.mxu0
    %v271 = vadd.f32 0.0, %v270
    %v272 = vpop.f32.mrf.mxu0
    %273 = vmatprep.mubr.f32.mxu0 0.0
    %274 = vmatmul.mubr.f32.gmra.mxu0 %v90
    %v275 = vpop.f32.mrf.mxu0
    %v276 = vadd.f32 0.0, %v275
    %v277 = vpop.f32.mrf.mxu0
    %278 = vmatprep.mubr.f32.mxu0 0.0
    %279 = vmatmul.mubr.f32.gmra.mxu0 %v93
    %v280 = vpop.f32.mrf.mxu0
    %v281 = vadd.f32 0.0, %v280
    %v282 = vpop.f32.mrf.mxu0
    %283 = vmatprep.mubr.f32.mxu0 0.0
    %284 = vmatmul.mubr.f32.gmra.mxu0 %v96
    %v285 = vpop.f32.mrf.mxu0
    %v286 = vadd.f32 0.0, %v285
    %v287 = vpop.f32.mrf.mxu0
    %288 = vmatprep.mubr.f32.mxu0 0.0
    %289 = vmatmul.mubr.f32.gmra.mxu0 %v99
    %v290 = vpop.f32.mrf.mxu0
    %v291 = vadd.f32 0.0, %v290
    %v292 = vpop.f32.mrf.mxu0
    %293 = vdwg.mxu0
    %v295 = vlaneseq
    %v296 = vshrl.u32 %v295, 7
    %v297 = vsub.s32 0, %v296
    %v298 = vrot.slane %v51, %v297
    %v300 = vsub.f32 %v298, %v216
    %v301 = vsub.f32 %v298, %v221
    %v302 = vsub.f32 %v298, %v226
    %v303 = vsub.f32 %v298, %v231
    %v304 = vsub.f32 %v298, %v236
    %v305 = vsub.f32 %v298, %v241
    %v306 = vsub.f32 %v298, %v246
    %v307 = vsub.f32 %v298, %v251
    %v308 = vsub.f32 %v298, %v256
    %v309 = vsub.f32 %v298, %v261
    %v310 = vsub.f32 %v298, %v266
    %v311 = vsub.f32 %v298, %v271
    %v312 = vsub.f32 %v298, %v276
    %v313 = vsub.f32 %v298, %v281
    %v314 = vsub.f32 %v298, %v286
    %v315 = vsub.f32 %v298, %v291
    %316 = vmin.xlane.f32.xlu0 %v300
    %v317 = vpop.xlane.xlu0 %316
    %318 = vmin.xlane.f32.xlu0 %v301
    %v319 = vpop.xlane.xlu0 %318
    %320 = vmin.xlane.f32.xlu0 %v302
    %v321 = vpop.xlane.xlu0 %320
    %322 = vmin.xlane.f32.xlu0 %v303
    %v323 = vpop.xlane.xlu0 %322
    %324 = vmin.xlane.f32.xlu0 %v304
    %v325 = vpop.xlane.xlu0 %324
    %326 = vmin.xlane.f32.xlu0 %v305
    %v327 = vpop.xlane.xlu0 %326
    %328 = vmin.xlane.f32.xlu0 %v306
    %v329 = vpop.xlane.xlu0 %328
    %330 = vmin.xlane.f32.xlu0 %v307
    %v331 = vpop.xlane.xlu0 %330
    %332 = vmin.xlane.f32.xlu0 %v308
    %v333 = vpop.xlane.xlu0 %332
    %334 = vmin.xlane.f32.xlu0 %v309
    %v335 = vpop.xlane.xlu0 %334
    %336 = vmin.xlane.f32.xlu0 %v310
    %v337 = vpop.xlane.xlu0 %336
    %338 = vmin.xlane.f32.xlu0 %v311
    %v339 = vpop.xlane.xlu0 %338
    %340 = vmin.xlane.f32.xlu0 %v312
    %v341 = vpop.xlane.xlu0 %340
    %342 = vmin.xlane.f32.xlu0 %v313
    %v343 = vpop.xlane.xlu0 %342
    %344 = vmin.xlane.f32.xlu0 %v314
    %v345 = vpop.xlane.xlu0 %344
    %346 = vmin.xlane.f32.xlu0 %v315
    %v347 = vpop.xlane.xlu0 %346
    %v348 = vlaneseq
    %v349 = vand.u32 %v348, 127
    %vm350 = vcmp.le.f32.partialorder %v300, %v317
    %vm351 = vcmp.le.f32.partialorder %v301, %v319
    %vm352 = vcmp.le.f32.partialorder %v302, %v321
    %vm353 = vcmp.le.f32.partialorder %v303, %v323
    %vm354 = vcmp.le.f32.partialorder %v304, %v325
    %vm355 = vcmp.le.f32.partialorder %v305, %v327
    %vm356 = vcmp.le.f32.partialorder %v306, %v329
    %vm357 = vcmp.le.f32.partialorder %v307, %v331
    %vm358 = vcmp.le.f32.partialorder %v308, %v333
    %vm359 = vcmp.le.f32.partialorder %v309, %v335
    %vm360 = vcmp.le.f32.partialorder %v310, %v337
    %vm361 = vcmp.le.f32.partialorder %v311, %v339
    %vm362 = vcmp.le.f32.partialorder %v312, %v341
    %vm363 = vcmp.le.f32.partialorder %v313, %v343
    %vm364 = vcmp.le.f32.partialorder %v314, %v345
    %vm365 = vcmp.le.f32.partialorder %v315, %v347
    %v366 = vsel %vm350, %v349, 128
    %v367 = vsel %vm351, %v349, 128
    %v368 = vsel %vm352, %v349, 128
    %v369 = vsel %vm353, %v349, 128
    %v370 = vsel %vm354, %v349, 128
    %v371 = vsel %vm355, %v349, 128
    %v372 = vsel %vm356, %v349, 128
    %v373 = vsel %vm357, %v349, 128
    %v374 = vsel %vm358, %v349, 128
    %v375 = vsel %vm359, %v349, 128
    %v376 = vsel %vm360, %v349, 128
    %v377 = vsel %vm361, %v349, 128
    %v378 = vsel %vm362, %v349, 128
    %v379 = vsel %vm363, %v349, 128
    %v380 = vsel %vm364, %v349, 128
    %v381 = vsel %vm365, %v349, 128
    %v382 = vand.u32 %v366, 65535
    %v383 = vshra.s32 %v366, 16
    %v384 = vcvt.s32.f32 %v382
    %v385 = vcvt.s32.f32 %v383
    %386 = vmin.xlane.f32.xlu0 %v385
    %v387 = vpop.xlane.xlu0 %386
    %vm388 = vcmp.eq.f32.partialorder %v385, %v387
    %v389 = vsel %vm388, %v384, inf
    %390 = vmin.xlane.f32.xlu0 %v389
    %v391 = vpop.xlane.xlu0 %390
    %v392 = vcvt.f32.s32 %v391
    %v393 = vcvt.f32.s32 %v387
    %v394 = vshll.u32 %v393, 16
    %v395 = vadd.s32 %v394, %v392
    %v396 = vand.u32 %v367, 65535
    %v397 = vshra.s32 %v367, 16
    %v398 = vcvt.s32.f32 %v396
    %v399 = vcvt.s32.f32 %v397
    %400 = vmin.xlane.f32.xlu0 %v399
    %v401 = vpop.xlane.xlu0 %400
    %vm402 = vcmp.eq.f32.partialorder %v399, %v401
    %v403 = vsel %vm402, %v398, inf
    %404 = vmin.xlane.f32.xlu0 %v403
    %v405 = vpop.xlane.xlu0 %404
    %v406 = vcvt.f32.s32 %v405
    %v407 = vcvt.f32.s32 %v401
    %v408 = vshll.u32 %v407, 16
    %v409 = vadd.s32 %v408, %v406
    %v410 = vand.u32 %v368, 65535
    %v411 = vshra.s32 %v368, 16
    %v412 = vcvt.s32.f32 %v410
    %v413 = vcvt.s32.f32 %v411
    %414 = vmin.xlane.f32.xlu0 %v413
    %v415 = vpop.xlane.xlu0 %414
    %vm416 = vcmp.eq.f32.partialorder %v413, %v415
    %v417 = vsel %vm416, %v412, inf
    %418 = vmin.xlane.f32.xlu0 %v417
    %v419 = vpop.xlane.xlu0 %418
    %v420 = vcvt.f32.s32 %v419
    %v421 = vcvt.f32.s32 %v415
    %v422 = vshll.u32 %v421, 16
    %v423 = vadd.s32 %v422, %v420
    %v424 = vand.u32 %v369, 65535
    %v425 = vshra.s32 %v369, 16
    %v426 = vcvt.s32.f32 %v424
    %v427 = vcvt.s32.f32 %v425
    %428 = vmin.xlane.f32.xlu0 %v427
    %v429 = vpop.xlane.xlu0 %428
    %vm430 = vcmp.eq.f32.partialorder %v427, %v429
    %v431 = vsel %vm430, %v426, inf
    %432 = vmin.xlane.f32.xlu0 %v431
    %v433 = vpop.xlane.xlu0 %432
    %v434 = vcvt.f32.s32 %v433
    %v435 = vcvt.f32.s32 %v429
    %v436 = vshll.u32 %v435, 16
    %v437 = vadd.s32 %v436, %v434
    %v438 = vand.u32 %v370, 65535
    %v439 = vshra.s32 %v370, 16
    %v440 = vcvt.s32.f32 %v438
    %v441 = vcvt.s32.f32 %v439
    %442 = vmin.xlane.f32.xlu0 %v441
    %v443 = vpop.xlane.xlu0 %442
    %vm444 = vcmp.eq.f32.partialorder %v441, %v443
    %v445 = vsel %vm444, %v440, inf
    %446 = vmin.xlane.f32.xlu0 %v445
    %v447 = vpop.xlane.xlu0 %446
    %v448 = vcvt.f32.s32 %v447
    %v449 = vcvt.f32.s32 %v443
    %v450 = vshll.u32 %v449, 16
    %v451 = vadd.s32 %v450, %v448
    %v452 = vand.u32 %v371, 65535
    %v453 = vshra.s32 %v371, 16
    %v454 = vcvt.s32.f32 %v452
    %v455 = vcvt.s32.f32 %v453
    %456 = vmin.xlane.f32.xlu0 %v455
    %v457 = vpop.xlane.xlu0 %456
    %vm458 = vcmp.eq.f32.partialorder %v455, %v457
    %v459 = vsel %vm458, %v454, inf
    %460 = vmin.xlane.f32.xlu0 %v459
    %v461 = vpop.xlane.xlu0 %460
    %v462 = vcvt.f32.s32 %v461
    %v463 = vcvt.f32.s32 %v457
    %v464 = vshll.u32 %v463, 16
    %v465 = vadd.s32 %v464, %v462
    %v466 = vand.u32 %v372, 65535
    %v467 = vshra.s32 %v372, 16
    %v468 = vcvt.s32.f32 %v466
    %v469 = vcvt.s32.f32 %v467
    %470 = vmin.xlane.f32.xlu0 %v469
    %v471 = vpop.xlane.xlu0 %470
    %vm472 = vcmp.eq.f32.partialorder %v469, %v471
    %v473 = vsel %vm472, %v468, inf
    %474 = vmin.xlane.f32.xlu0 %v473
    %v475 = vpop.xlane.xlu0 %474
    %v476 = vcvt.f32.s32 %v475
    %v477 = vcvt.f32.s32 %v471
    %v478 = vshll.u32 %v477, 16
    %v479 = vadd.s32 %v478, %v476
    %v480 = vand.u32 %v373, 65535
    %v481 = vshra.s32 %v373, 16
    %v482 = vcvt.s32.f32 %v480
    %v483 = vcvt.s32.f32 %v481
    %484 = vmin.xlane.f32.xlu0 %v483
    %v485 = vpop.xlane.xlu0 %484
    %vm486 = vcmp.eq.f32.partialorder %v483, %v485
    %v487 = vsel %vm486, %v482, inf
    %488 = vmin.xlane.f32.xlu0 %v487
    %v489 = vpop.xlane.xlu0 %488
    %v490 = vcvt.f32.s32 %v489
    %v491 = vcvt.f32.s32 %v485
    %v492 = vshll.u32 %v491, 16
    %v493 = vadd.s32 %v492, %v490
    %v494 = vand.u32 %v374, 65535
    %v495 = vshra.s32 %v374, 16
    %v496 = vcvt.s32.f32 %v494
    %v497 = vcvt.s32.f32 %v495
    %498 = vmin.xlane.f32.xlu0 %v497
    %v499 = vpop.xlane.xlu0 %498
    %vm500 = vcmp.eq.f32.partialorder %v497, %v499
    %v501 = vsel %vm500, %v496, inf
    %502 = vmin.xlane.f32.xlu0 %v501
    %v503 = vpop.xlane.xlu0 %502
    %v504 = vcvt.f32.s32 %v503
    %v505 = vcvt.f32.s32 %v499
    %v506 = vshll.u32 %v505, 16
    %v507 = vadd.s32 %v506, %v504
    %v508 = vand.u32 %v375, 65535
    %v509 = vshra.s32 %v375, 16
    %v510 = vcvt.s32.f32 %v508
    %v511 = vcvt.s32.f32 %v509
    %512 = vmin.xlane.f32.xlu0 %v511
    %v513 = vpop.xlane.xlu0 %512
    %vm514 = vcmp.eq.f32.partialorder %v511, %v513
    %v515 = vsel %vm514, %v510, inf
    %516 = vmin.xlane.f32.xlu0 %v515
    %v517 = vpop.xlane.xlu0 %516
    %v518 = vcvt.f32.s32 %v517
    %v519 = vcvt.f32.s32 %v513
    %v520 = vshll.u32 %v519, 16
    %v521 = vadd.s32 %v520, %v518
    %v522 = vand.u32 %v376, 65535
    %v523 = vshra.s32 %v376, 16
    %v524 = vcvt.s32.f32 %v522
    %v525 = vcvt.s32.f32 %v523
    %526 = vmin.xlane.f32.xlu0 %v525
    %v527 = vpop.xlane.xlu0 %526
    %vm528 = vcmp.eq.f32.partialorder %v525, %v527
    %v529 = vsel %vm528, %v524, inf
    %530 = vmin.xlane.f32.xlu0 %v529
    %v531 = vpop.xlane.xlu0 %530
    %v532 = vcvt.f32.s32 %v531
    %v533 = vcvt.f32.s32 %v527
    %v534 = vshll.u32 %v533, 16
    %v535 = vadd.s32 %v534, %v532
    %v536 = vand.u32 %v377, 65535
    %v537 = vshra.s32 %v377, 16
    %v538 = vcvt.s32.f32 %v536
    %v539 = vcvt.s32.f32 %v537
    %540 = vmin.xlane.f32.xlu0 %v539
    %v541 = vpop.xlane.xlu0 %540
    %vm542 = vcmp.eq.f32.partialorder %v539, %v541
    %v543 = vsel %vm542, %v538, inf
    %544 = vmin.xlane.f32.xlu0 %v543
    %v545 = vpop.xlane.xlu0 %544
    %v546 = vcvt.f32.s32 %v545
    %v547 = vcvt.f32.s32 %v541
    %v548 = vshll.u32 %v547, 16
    %v549 = vadd.s32 %v548, %v546
    %v550 = vand.u32 %v378, 65535
    %v551 = vshra.s32 %v378, 16
    %v552 = vcvt.s32.f32 %v550
    %v553 = vcvt.s32.f32 %v551
    %554 = vmin.xlane.f32.xlu0 %v553
    %v555 = vpop.xlane.xlu0 %554
    %vm556 = vcmp.eq.f32.partialorder %v553, %v555
    %v557 = vsel %vm556, %v552, inf
    %558 = vmin.xlane.f32.xlu0 %v557
    %v559 = vpop.xlane.xlu0 %558
    %v560 = vcvt.f32.s32 %v559
    %v561 = vcvt.f32.s32 %v555
    %v562 = vshll.u32 %v561, 16
    %v563 = vadd.s32 %v562, %v560
    %v564 = vand.u32 %v379, 65535
    %v565 = vshra.s32 %v379, 16
    %v566 = vcvt.s32.f32 %v564
    %v567 = vcvt.s32.f32 %v565
    %568 = vmin.xlane.f32.xlu0 %v567
    %v569 = vpop.xlane.xlu0 %568
    %vm570 = vcmp.eq.f32.partialorder %v567, %v569
    %v571 = vsel %vm570, %v566, inf
    %572 = vmin.xlane.f32.xlu0 %v571
    %v573 = vpop.xlane.xlu0 %572
    %v574 = vcvt.f32.s32 %v573
    %v575 = vcvt.f32.s32 %v569
    %v576 = vshll.u32 %v575, 16
    %v577 = vadd.s32 %v576, %v574
    %v578 = vand.u32 %v380, 65535
    %v579 = vshra.s32 %v380, 16
    %v580 = vcvt.s32.f32 %v578
    %v581 = vcvt.s32.f32 %v579
    %582 = vmin.xlane.f32.xlu0 %v581
    %v583 = vpop.xlane.xlu0 %582
    %vm584 = vcmp.eq.f32.partialorder %v581, %v583
    %v585 = vsel %vm584, %v580, inf
    %586 = vmin.xlane.f32.xlu0 %v585
    %v587 = vpop.xlane.xlu0 %586
    %v588 = vcvt.f32.s32 %v587
    %v589 = vcvt.f32.s32 %v583
    %v590 = vshll.u32 %v589, 16
    %v591 = vadd.s32 %v590, %v588
    %v592 = vand.u32 %v381, 65535
    %v593 = vshra.s32 %v381, 16
    %v594 = vcvt.s32.f32 %v592
    %v595 = vcvt.s32.f32 %v593
    %596 = vmin.xlane.f32.xlu0 %v595
    %v597 = vpop.xlane.xlu0 %596
    %vm598 = vcmp.eq.f32.partialorder %v595, %v597
    %v599 = vsel %vm598, %v594, inf
    %600 = vmin.xlane.f32.xlu0 %v599
    %v601 = vpop.xlane.xlu0 %600
    %v602 = vcvt.f32.s32 %v601
    %v603 = vcvt.f32.s32 %v597
    %v604 = vshll.u32 %v603, 16
    %v605 = vadd.s32 %v604, %v602
    %vm606 = vcmp.eq.s32.totalorder %v366, %v395
    %vm607 = vcmp.eq.s32.totalorder %v367, %v409
    %vm608 = vcmp.eq.s32.totalorder %v368, %v423
    %vm609 = vcmp.eq.s32.totalorder %v369, %v437
    %vm610 = vcmp.eq.s32.totalorder %v370, %v451
    %vm611 = vcmp.eq.s32.totalorder %v371, %v465
    %vm612 = vcmp.eq.s32.totalorder %v372, %v479
    %vm613 = vcmp.eq.s32.totalorder %v373, %v493
    %vm614 = vcmp.eq.s32.totalorder %v374, %v507
    %vm615 = vcmp.eq.s32.totalorder %v375, %v521
    %vm616 = vcmp.eq.s32.totalorder %v376, %v535
    %vm617 = vcmp.eq.s32.totalorder %v377, %v549
    %vm618 = vcmp.eq.s32.totalorder %v378, %v563
    %vm619 = vcmp.eq.s32.totalorder %v379, %v577
    %vm620 = vcmp.eq.s32.totalorder %v380, %v591
    %vm621 = vcmp.eq.s32.totalorder %v381, %v605
    %v622 = vsel %vm606, 1, 0
    %v623 = vsel %vm607, 1, 0
    %v624 = vsel %vm608, 1, 0
    %v625 = vsel %vm609, 1, 0
    %v626 = vsel %vm610, 1, 0
    %v627 = vsel %vm611, 1, 0
    %v628 = vsel %vm612, 1, 0
    %v629 = vsel %vm613, 1, 0
    %v630 = vsel %vm614, 1, 0
    %v631 = vsel %vm615, 1, 0
    %v632 = vsel %vm616, 1, 0
    %v633 = vsel %vm617, 1, 0
    %v634 = vsel %vm618, 1, 0
    %v635 = vsel %vm619, 1, 0
    %v636 = vsel %vm620, 1, 0
    %v637 = vsel %vm621, 1, 0
    %v638 = vcvt.s32.f32 %v622
    %v639 = vcvt.s32.f32 %v623
    %v640 = vcvt.s32.f32 %v624
    %v641 = vcvt.s32.f32 %v625
    %v642 = vcvt.s32.f32 %v626
    %v643 = vcvt.s32.f32 %v627
    %v644 = vcvt.s32.f32 %v628
    %v645 = vcvt.s32.f32 %v629
    %v646 = vcvt.s32.f32 %v630
    %v647 = vcvt.s32.f32 %v631
    %v648 = vcvt.s32.f32 %v632
    %v649 = vcvt.s32.f32 %v633
    %v650 = vcvt.s32.f32 %v634
    %v651 = vcvt.s32.f32 %v635
    %v652 = vcvt.s32.f32 %v636
    %v653 = vcvt.s32.f32 %v637
    %654 = vmatprep.subr.mxu0 0.0
    %655 = vmatpush1.msra.mxu0 %v50
    %656 = vmatprep.subr.mxu0 0.0
    %657 = vmatpush1.msra.mxu0 %v49
    %658 = vmatprep.subr.mxu0 0.0
    %659 = vmatpush1.msra.mxu0 %v48
    %660 = vmatprep.subr.mxu0 0.0
    %661 = vmatpush1.msra.mxu0 %v47
    %662 = vmatprep.subr.mxu0 0.0
    %663 = vmatpush1.msra.mxu0 %v46
    %664 = vmatprep.subr.mxu0 0.0
    %665 = vmatpush1.msra.mxu0 %v45
    %666 = vmatprep.subr.mxu0 0.0
    %667 = vmatpush1.msra.mxu0 %v44
    %668 = vmatprep.subr.mxu0 0.0
    %669 = vmatpush1.msra.mxu0 %v43
    %670 = vmatprep.subr.mxu0 0.0
    %671 = vmatpush1.msra.mxu0 %v42
    %672 = vmatprep.subr.mxu0 0.0
    %673 = vmatpush1.msra.mxu0 %v41
    %674 = vmatprep.subr.mxu0 0.0
    %675 = vmatpush1.msra.mxu0 %v40
    %676 = vmatprep.subr.mxu0 0.0
    %677 = vmatpush1.msra.mxu0 %v39
    %678 = vmatprep.subr.mxu0 0.0
    %679 = vmatpush1.msra.mxu0 %v38
    %680 = vmatprep.subr.mxu0 0.0
    %681 = vmatpush1.msra.mxu0 %v37
    %682 = vmatprep.subr.mxu0 0.0
    %683 = vmatpush1.msra.mxu0 %v36
    %684 = vmatprep.subr.mxu0 0.0
    %685 = vmatpush1.msra.mxu0 %v35
    %686 = vmatprep.subr.mxu0 0.0
    %687 = vmatpush2.msra.mxu0 0.0
    %688 = vmatprep.subr.mxu0 0.0
    %689 = vmatpush2.msra.mxu0 0.0
    %690 = vmatprep.subr.mxu0 0.0
    %691 = vmatpush2.msra.mxu0 0.0
    %692 = vmatprep.subr.mxu0 0.0
    %693 = vmatpush2.msra.mxu0 0.0
    %694 = vmatprep.subr.mxu0 0.0
    %695 = vmatpush2.msra.mxu0 0.0
    %696 = vmatprep.subr.mxu0 0.0
    %697 = vmatpush2.msra.mxu0 0.0
    %698 = vmatprep.subr.mxu0 0.0
    %699 = vmatpush2.msra.mxu0 0.0
    %700 = vmatprep.subr.mxu0 0.0
    %701 = vmatpush2.msra.mxu0 0.0
    %702 = vmatprep.subr.mxu0 0.0
    %703 = vmatpush2.msra.mxu0 0.0
    %704 = vmatprep.subr.mxu0 0.0
    %705 = vmatpush2.msra.mxu0 0.0
    %706 = vmatprep.subr.mxu0 0.0
    %707 = vmatpush2.msra.mxu0 0.0
    %708 = vmatprep.subr.mxu0 0.0
    %709 = vmatpush2.msra.mxu0 0.0
    %710 = vmatprep.subr.mxu0 0.0
    %711 = vmatpush2.msra.mxu0 0.0
    %712 = vmatprep.subr.mxu0 0.0
    %713 = vmatpush2.msra.mxu0 0.0
    %714 = vmatprep.subr.mxu0 0.0
    %715 = vmatpush2.msra.mxu0 0.0
    %716 = vmatprep.subr.mxu0 0.0
    %717 = vmatpush2.msra.mxu0 0.0
    %718 = vmatprep.mubr.f32.mxu0 0.0
    %719 = vmatmul.mubr.f32.gmra.mxu0 %v638
    %v720 = vpop.f32.mrf.mxu0
    %v721 = vadd.f32 0.0, %v720
    %v722 = vpop.f32.mrf.mxu0
    %723 = vmatprep.mubr.f32.mxu0 0.0
    %724 = vmatmul.mubr.f32.gmra.mxu0 %v639
    %v725 = vpop.f32.mrf.mxu0
    %v726 = vadd.f32 0.0, %v725
    %v727 = vpop.f32.mrf.mxu0
    %728 = vmatprep.mubr.f32.mxu0 0.0
    %729 = vmatmul.mubr.f32.gmra.mxu0 %v640
    %v730 = vpop.f32.mrf.mxu0
    %v731 = vadd.f32 0.0, %v730
    %v732 = vpop.f32.mrf.mxu0
    %733 = vmatprep.mubr.f32.mxu0 0.0
    %734 = vmatmul.mubr.f32.gmra.mxu0 %v641
    %v735 = vpop.f32.mrf.mxu0
    %v736 = vadd.f32 0.0, %v735
    %v737 = vpop.f32.mrf.mxu0
    %738 = vmatprep.mubr.f32.mxu0 0.0
    %739 = vmatmul.mubr.f32.gmra.mxu0 %v642
    %v740 = vpop.f32.mrf.mxu0
    %v741 = vadd.f32 0.0, %v740
    %v742 = vpop.f32.mrf.mxu0
    %743 = vmatprep.mubr.f32.mxu0 0.0
    %744 = vmatmul.mubr.f32.gmra.mxu0 %v643
    %v745 = vpop.f32.mrf.mxu0
    %v746 = vadd.f32 0.0, %v745
    %v747 = vpop.f32.mrf.mxu0
    %748 = vmatprep.mubr.f32.mxu0 0.0
    %749 = vmatmul.mubr.f32.gmra.mxu0 %v644
    %v750 = vpop.f32.mrf.mxu0
    %v751 = vadd.f32 0.0, %v750
    %v752 = vpop.f32.mrf.mxu0
    %753 = vmatprep.mubr.f32.mxu0 0.0
    %754 = vmatmul.mubr.f32.gmra.mxu0 %v645
    %v755 = vpop.f32.mrf.mxu0
    %v756 = vadd.f32 0.0, %v755
    %v757 = vpop.f32.mrf.mxu0
    %758 = vmatprep.mubr.f32.mxu0 0.0
    %759 = vmatmul.mubr.f32.gmra.mxu0 %v646
    %v760 = vpop.f32.mrf.mxu0
    %v761 = vadd.f32 0.0, %v760
    %v762 = vpop.f32.mrf.mxu0
    %763 = vmatprep.mubr.f32.mxu0 0.0
    %764 = vmatmul.mubr.f32.gmra.mxu0 %v647
    %v765 = vpop.f32.mrf.mxu0
    %v766 = vadd.f32 0.0, %v765
    %v767 = vpop.f32.mrf.mxu0
    %768 = vmatprep.mubr.f32.mxu0 0.0
    %769 = vmatmul.mubr.f32.gmra.mxu0 %v648
    %v770 = vpop.f32.mrf.mxu0
    %v771 = vadd.f32 0.0, %v770
    %v772 = vpop.f32.mrf.mxu0
    %773 = vmatprep.mubr.f32.mxu0 0.0
    %774 = vmatmul.mubr.f32.gmra.mxu0 %v649
    %v775 = vpop.f32.mrf.mxu0
    %v776 = vadd.f32 0.0, %v775
    %v777 = vpop.f32.mrf.mxu0
    %778 = vmatprep.mubr.f32.mxu0 0.0
    %779 = vmatmul.mubr.f32.gmra.mxu0 %v650
    %v780 = vpop.f32.mrf.mxu0
    %v781 = vadd.f32 0.0, %v780
    %v782 = vpop.f32.mrf.mxu0
    %783 = vmatprep.mubr.f32.mxu0 0.0
    %784 = vmatmul.mubr.f32.gmra.mxu0 %v651
    %v785 = vpop.f32.mrf.mxu0
    %v786 = vadd.f32 0.0, %v785
    %v787 = vpop.f32.mrf.mxu0
    %788 = vmatprep.mubr.f32.mxu0 0.0
    %789 = vmatmul.mubr.f32.gmra.mxu0 %v652
    %v790 = vpop.f32.mrf.mxu0
    %v791 = vadd.f32 0.0, %v790
    %v792 = vpop.f32.mrf.mxu0
    %793 = vmatprep.mubr.f32.mxu0 0.0
    %794 = vmatmul.mubr.f32.gmra.mxu0 %v653
    %v795 = vpop.f32.mrf.mxu0
    %v796 = vadd.f32 0.0, %v795
    %v797 = vpop.f32.mrf.mxu0
    %798 = vdwg.mxu0
    %799 = vst.msk [vmem:[%s3] sm:$0xff] %vm52, %v721
    %800 = vst.msk [vmem:[%s3 + $0x8] sm:$0xff] %vm52, %v726
    %801 = vst.msk [vmem:[%s3 + $0x10] sm:$0xff] %vm52, %v731
    %802 = vst.msk [vmem:[%s3 + $0x18] sm:$0xff] %vm52, %v736
    %803 = vst.msk [vmem:[%s3 + $0x20] sm:$0xff] %vm52, %v741
    %804 = vst.msk [vmem:[%s3 + $0x28] sm:$0xff] %vm52, %v746
    %805 = vst.msk [vmem:[%s3 + $0x30] sm:$0xff] %vm52, %v751
    %806 = vst.msk [vmem:[%s3 + $0x38] sm:$0xff] %vm52, %v756
    %807 = vst.msk [vmem:[%s3 + $0x40] sm:$0xff] %vm52, %v761
    %808 = vst.msk [vmem:[%s3 + $0x48] sm:$0xff] %vm52, %v766
    %809 = vst.msk [vmem:[%s3 + $0x50] sm:$0xff] %vm52, %v771
    %810 = vst.msk [vmem:[%s3 + $0x58] sm:$0xff] %vm52, %v776
    %811 = vst.msk [vmem:[%s3 + $0x60] sm:$0xff] %vm52, %v781
    %812 = vst.msk [vmem:[%s3 + $0x68] sm:$0xff] %vm52, %v786
    %813 = vst.msk [vmem:[%s3 + $0x70] sm:$0xff] %vm52, %v791
    %814 = vst.msk [vmem:[%s3 + $0x78] sm:$0xff] %vm52, %v796
    %v815 = vsub.f32 %v721, %v19
    %v816 = vsub.f32 %v726, %v20
    %v817 = vsub.f32 %v731, %v21
    %v818 = vsub.f32 %v736, %v22
    %v819 = vsub.f32 %v741, %v23
    %v820 = vsub.f32 %v746, %v24
    %v821 = vsub.f32 %v751, %v25
    %v822 = vsub.f32 %v756, %v26
    %v823 = vsub.f32 %v761, %v27
    %v824 = vsub.f32 %v766, %v28
    %v825 = vsub.f32 %v771, %v29
    %v826 = vsub.f32 %v776, %v30
    %v827 = vsub.f32 %v781, %v31
    %v828 = vsub.f32 %v786, %v32
    %v829 = vsub.f32 %v791, %v33
    %v830 = vsub.f32 %v796, %v34
    %v831 = vmul.f32 %v815, %v815
    %v832 = vmul.f32 %v816, %v816
    %v833 = vmul.f32 %v817, %v817
    %v834 = vmul.f32 %v818, %v818
    %v835 = vmul.f32 %v819, %v819
    %v836 = vmul.f32 %v820, %v820
    %v837 = vmul.f32 %v821, %v821
    %v838 = vmul.f32 %v822, %v822
    %v839 = vmul.f32 %v823, %v823
    %v840 = vmul.f32 %v824, %v824
    %v841 = vmul.f32 %v825, %v825
    %v842 = vmul.f32 %v826, %v826
    %v843 = vmul.f32 %v827, %v827
    %v844 = vmul.f32 %v828, %v828
    %v845 = vmul.f32 %v829, %v829
    %v846 = vmul.f32 %v830, %v830
    %v847 = vsel %vm52, %v831, 0.0
    %v848 = vsel %vm52, %v832, 0.0
    %v849 = vadd.f32 %v847, %v848
    %v850 = vsel %vm52, %v833, 0.0
    %v851 = vadd.f32 %v849, %v850
    %v852 = vsel %vm52, %v834, 0.0
    %v853 = vadd.f32 %v851, %v852
    %v854 = vsel %vm52, %v835, 0.0
    %v855 = vadd.f32 %v853, %v854
    %v856 = vsel %vm52, %v836, 0.0
    %v857 = vadd.f32 %v855, %v856
    %v858 = vsel %vm52, %v837, 0.0
    %v859 = vadd.f32 %v857, %v858
    %v860 = vsel %vm52, %v838, 0.0
    %v861 = vadd.f32 %v859, %v860
    %v862 = vsel %vm52, %v839, 0.0
    %v863 = vadd.f32 %v861, %v862
    %v864 = vsel %vm52, %v840, 0.0
    %v865 = vadd.f32 %v863, %v864
    %v866 = vsel %vm52, %v841, 0.0
    %v867 = vadd.f32 %v865, %v866
    %v868 = vsel %vm52, %v842, 0.0
    %v869 = vadd.f32 %v867, %v868
    %v870 = vsel %vm52, %v843, 0.0
    %v871 = vadd.f32 %v869, %v870
    %v872 = vsel %vm52, %v844, 0.0
    %v873 = vadd.f32 %v871, %v872
    %v874 = vsel %vm52, %v845, 0.0
    %v875 = vadd.f32 %v873, %v874
    %v876 = vsel %vm52, %v846, 0.0
    %v877 = vadd.f32 %v875, %v876
    %878 = vadd.xlane.f32.xlu0 %v877
    %v879 = vpop.xlane.xlu0 %878
    %v880 = vrot.slane %v879, 4
    %v881 = vadd.f32 %v879, %v880
    %v882 = vrot.slane %v881, 2
    %v883 = vadd.f32 %v881, %v882
    %v884 = vrot.slane %v883, 1
    %v885 = vadd.f32 %v883, %v884
    %s886 = vtos %v885
    %v887 = vstv %s886
    %vm888 = vcmask 0
    %889 = vst.msk [vmem:[#allocation2] sm:$0x1] %vm888, %v887
    %890 = vmatprep.subr.mxu0 0.0
    %891 = vmatpush1.msra.mxu0 %v653
    %892 = vmatprep.subr.mxu0 0.0
    %893 = vmatpush1.msra.mxu0 %v652
    %894 = vmatprep.subr.mxu0 0.0
    %895 = vmatpush1.msra.mxu0 %v651
    %896 = vmatprep.subr.mxu0 0.0
    %897 = vmatpush1.msra.mxu0 %v650
    %898 = vmatprep.subr.mxu0 0.0
    %899 = vmatpush1.msra.mxu0 %v649
    %900 = vmatprep.subr.mxu0 0.0
    %901 = vmatpush1.msra.mxu0 %v648
    %902 = vmatprep.subr.mxu0 0.0
    %903 = vmatpush1.msra.mxu0 %v647
    %904 = vmatprep.subr.mxu0 0.0
    %905 = vmatpush1.msra.mxu0 %v646
    %906 = vmatprep.subr.mxu0 0.0
    %907 = vmatpush1.msra.mxu0 %v645
    %908 = vmatprep.subr.mxu0 0.0
    %909 = vmatpush1.msra.mxu0 %v644
    %910 = vmatprep.subr.mxu0 0.0
    %911 = vmatpush1.msra.mxu0 %v643
    %912 = vmatprep.subr.mxu0 0.0
    %913 = vmatpush1.msra.mxu0 %v642
    %914 = vmatprep.subr.mxu0 0.0
    %915 = vmatpush1.msra.mxu0 %v641
    %916 = vmatprep.subr.mxu0 0.0
    %917 = vmatpush1.msra.mxu0 %v640
    %918 = vmatprep.subr.mxu0 0.0
    %919 = vmatpush1.msra.mxu0 %v639
    %920 = vmatprep.subr.mxu0 0.0
    %921 = vmatpush1.msra.mxu0 %v638
    %922 = vmatprep.subr.mxu0 0.0
    %923 = vmatpush2.msra.mxu0 0.0
    %924 = vmatprep.subr.mxu0 0.0
    %925 = vmatpush2.msra.mxu0 0.0
    %926 = vmatprep.subr.mxu0 0.0
    %927 = vmatpush2.msra.mxu0 0.0
    %928 = vmatprep.subr.mxu0 0.0
    %929 = vmatpush2.msra.mxu0 0.0
    %930 = vmatprep.subr.mxu0 0.0
    %931 = vmatpush2.msra.mxu0 0.0
    %932 = vmatprep.subr.mxu0 0.0
    %933 = vmatpush2.msra.mxu0 0.0
    %934 = vmatprep.subr.mxu0 0.0
    %935 = vmatpush2.msra.mxu0 0.0
    %936 = vmatprep.subr.mxu0 0.0
    %937 = vmatpush2.msra.mxu0 0.0
    %938 = vmatprep.subr.mxu0 0.0
    %939 = vmatpush2.msra.mxu0 0.0
    %940 = vmatprep.subr.mxu0 0.0
    %941 = vmatpush2.msra.mxu0 0.0
    %942 = vmatprep.subr.mxu0 0.0
    %943 = vmatpush2.msra.mxu0 0.0
    %944 = vmatprep.subr.mxu0 0.0
    %945 = vmatpush2.msra.mxu0 0.0
    %946 = vmatprep.subr.mxu0 0.0
    %947 = vmatpush2.msra.mxu0 0.0
    %948 = vmatprep.subr.mxu0 0.0
    %949 = vmatpush2.msra.mxu0 0.0
    %950 = vmatprep.subr.mxu0 0.0
    %951 = vmatpush2.msra.mxu0 0.0
    %952 = vmatprep.subr.mxu0 0.0
    %953 = vmatpush2.msra.mxu0 0.0
    %954 = vmatprep.mubr.f32.mxu0 0.0
    %955 = vmatmul.mubr.f32.gmra.mxu0 1.0
    %v956 = vpop.f32.mrf.mxu0
    %v957 = vadd.f32 0.0, %v956
    %v958 = vpop.f32.mrf.mxu0
    %959 = vdwg.mxu0
    %960 = vst [vmem:[#allocation4] sm:$0x1] %v957
    // Predicated region
    $region14: #{tpu_custom_call.1} parent=1 // pred_check
      _
    $region15: #{tpu_custom_call.1} parent=1 // pred_check_branch
      %962 = sbr.rel (0) target = $region17
    $region16: #{tpu_custom_call.1} parent=1 // pred_region
      _
    $region17: #{tpu_custom_call.1} parent=1 // pred_fallthru
      _
    // Predicated region
    $region18: #{tpu_custom_call.1} parent=1 // pred_check
      _
    $region19: #{tpu_custom_call.1} parent=1 // pred_check_branch
      %964 = sbr.rel (0) target = $region21
    $region20: #{tpu_custom_call.1} parent=1 // pred_region
      %s966 = ssub.s32 16, 16
      %967 = vsyncadd [#allocation3], %s966
      %s969 = sshll.u32 [#allocation2], 4
      %s970 = int_to_ptr.vmem [resolvable:$true] %s969
      %972 = dma.vmem_to_hbm [thread:$0]  %s970, 16, %s4, [#allocation3]
    $region21: #{tpu_custom_call.1} parent=1 // pred_fallthru
      _
    // Predicated region
    $region22: #{tpu_custom_call.1} parent=1 // pred_check
      _
    $region23: #{tpu_custom_call.1} parent=1 // pred_check_branch
      %974 = sbr.rel (0) target = $region25
    $region24: #{tpu_custom_call.1} parent=1 // pred_region
      %s976 = ssub.s32 16, 16
      %977 = vsyncadd [#allocation5], %s976
      %s979 = sshll.u32 [#allocation4], 4
      %s980 = int_to_ptr.vmem [resolvable:$true] %s979
      %982 = dma.vmem_to_hbm [thread:$0]  %s980, 16, %s5, [#allocation5]
    $region25: #{tpu_custom_call.1} parent=1 // pred_fallthru
      _
    // Predicated region
    $region26: #{tpu_custom_call.1} parent=1 // pred_check
      _
    $region27: #{tpu_custom_call.1} parent=1 // pred_check_branch
      %984 = sbr.rel (0) target = $region29
    $region28: #{tpu_custom_call.1} parent=1 // pred_region
      _
    $region29: #{tpu_custom_call.1} parent=1 // pred_fallthru
      _
    // Predicated region
    $region30: #{tpu_custom_call.1} parent=1 // pred_check
      _
    $region31: #{tpu_custom_call.1} parent=1 // pred_check_branch
      %986 = sbr.rel (0) target = $region33
    $region32: #{tpu_custom_call.1} parent=1 // pred_region
      %987 = dma.done [#allocation3], 16
    $region33: #{tpu_custom_call.1} parent=1 // pred_fallthru
      _
    // Predicated region
    $region34: #{tpu_custom_call.1} parent=1 // pred_check
      _
    $region35: #{tpu_custom_call.1} parent=1 // pred_check_branch
      %989 = sbr.rel (0) target = $region37
    $region36: #{tpu_custom_call.1} parent=1 // pred_region
      %990 = dma.done [#allocation5], 16
    $region37: #{tpu_custom_call.1} parent=1 // pred_fallthru
      _
    %991 = vsyncpa [#allocation3], 1
    %992 = vsyncpa [#allocation5], 1

</llo_original>
